<compile_context>
chip_gen: v5e
topology: v5e:2x2
jax: 0.10.0
libtpu: 0.0.40
codegen_flags: <defaults>
</compile_context>

<pallas_src>
import jax
import jax.numpy as jnp
from jax.experimental import pallas as pl
from jax.experimental.pallas import tpu as pltpu


def _round_up(x, m):
    return ((x + m - 1) // m) * m


def _vmem_capacity_bytes():
    # Physical per-TensorCore VMEM: v5e/v6e = 128 MiB, v7x = 64 MiB.
    try:
        return int(pltpu.get_tpu_info().vmem_capacity_bytes)
    except Exception:
        return 64 * 1024 * 1024  # conservative: assume the smallest (v7x)


def _patch_embed_kernel(x_ref, w_ref, b_ref, o_ref):
    # x_ref: [TM, Kp]  bf16 activation tile (pipelined over the M grid)
    # w_ref: [Kp, Np]  bf16 flattened conv weight (constant index_map -> resident)
    # b_ref: [1,  Np]  f32 conv bias (resident)
    # o_ref: [TM, Np]  output tile
    acc = jnp.dot(x_ref[...], w_ref[...], preferred_element_type=jnp.float32)
    o_ref[...] = (acc + b_ref[...]).astype(o_ref.dtype)


def patch_embed(x, weight, bias, patch_size, *, block_m=512, out_dtype=None):
    """x: [B, C, H, W] (NCHW), weight: [E, C, ph, pw], bias: [E] -> [B, num_patches, E].

    block_m: row tile upper bound (swept 512-1024 is fine on v5e/v6e; the VMEM
    gate below shrinks it automatically if the footprint would not fit).
    out_dtype: output dtype; default x.dtype (set jnp.bfloat16 if the consumer
    tolerates it - halves the dominant output HBM stream on v6e/v7x).
    """
    B, C, H, W = x.shape
    ph, pw = patch_size
    E = weight.shape[0]
    assert H % ph == 0 and W % pw == 0, "image size must be divisible by patch size"
    hp, wp = H // ph, W // pw
    num_patches = hp * wp

    out_dtype = x.dtype if out_dtype is None else out_dtype
    out_bytes = jnp.dtype(out_dtype).itemsize

    # --- patch extraction in (C, ph, pw) order (matches PyTorch conv weight) ---
    # One explicit XLA pass over x. Cast to bf16 *before* the transpose so the
    # materialized copy is half-size.
    # TODO(synk): fold this reorder into the kernel (row-tiles of x + in-VMEM
    # flatten) to remove the extra HBM pass on mem-bound chips; allow_input_fusion
    # was dropped on purpose - a fused transpose becomes pw-wide (~32 B) gather DMAs.
    xp = x.astype(jnp.bfloat16)
    xp = xp.reshape(B, C, hp, ph, wp, pw)
    xp = jnp.transpose(xp, (0, 2, 4, 1, 3, 5))
    xp = xp.reshape(B * num_patches, C * ph * pw)

    M, K = xp.shape

    # MXU / lane alignment: pad K (contraction) and E (output lanes) to 128.
    k_pad = _round_up(K, 128)
    n_pad = _round_up(E, 128)

    # Row tile: multiple of 16 (bf16 min sublane tile). For small M split into
    # >= 2 grid steps when possible so both v7x TensorCores get work.
    tm = min(block_m, _round_up(M, 16))
    if tm >= M and M > 16:
        tm = _round_up(-(-M // 2), 16)

    # VMEM budget. Weight/bias use a constant index_map (fetched once) but the
    # pipeline still allocates its default 2 buffers for them; budget for that.
    def footprint(tm_):
        return (2 * tm_ * k_pad * 2               # activation tiles (bf16, 2 bufs)
                + 2 * k_pad * n_pad * 2           # weight (bf16, 2 bufs)
                + 2 * n_pad * 4                   # bias   (f32, 2 bufs)
                + 2 * tm_ * n_pad * out_bytes)    # output tiles (2 bufs)

    vmem_budget = int(_vmem_capacity_bytes() * 0.875)   # headroom for Mosaic internals
    while footprint(tm) > vmem_budget and tm > 16:
        tm = max(16, _round_up(tm // 2, 16))
    # TODO(synk): if the resident weight alone ever exceeds the budget (huge K*E),
    # add an N grid axis to tile it; unnecessary at ViT-scale shapes.

    m_pad = _round_up(M, tm)
    grid_m = m_pad // tm

    if m_pad != M:
        xp = jnp.pad(xp, ((0, m_pad - M), (0, 0)))
    if k_pad != K:
        xp = jnp.pad(xp, ((0, 0), (0, k_pad - K)))

    w2d = weight.reshape(E, K).T.astype(jnp.bfloat16)       # [K, E]
    b2d = bias.astype(jnp.float32).reshape(1, E)            # [1, E]
    if k_pad != K:
        w2d = jnp.pad(w2d, ((0, k_pad - K), (0, 0)))
    if n_pad != E:
        w2d = jnp.pad(w2d, ((0, 0), (0, n_pad - E)))
        b2d = jnp.pad(b2d, ((0, 0), (0, n_pad - E)))

    vmem_limit = min(vmem_budget, max(int(footprint(tm) * 1.25), 32 * 1024 * 1024))

    cost = pl.CostEstimate(
        flops=2 * m_pad * k_pad * n_pad,
        transcendentals=0,
        bytes_accessed=int(xp.size * 2 + w2d.size * 2 + b2d.size * 4
                           + m_pad * n_pad * out_bytes),
    )

    out = pl.pallas_call(
        _patch_embed_kernel,
        out_shape=jax.ShapeDtypeStruct((m_pad, n_pad), out_dtype),
        grid_spec=pltpu.PrefetchScalarGridSpec(
            num_scalar_prefetch=0,
            grid=(grid_m,),
            in_specs=[
                pl.BlockSpec((tm, k_pad), lambda i: (i, 0)),      # activations: tiled over M
                pl.BlockSpec((k_pad, n_pad), lambda i: (0, 0)),   # weight: constant -> resident
                pl.BlockSpec((1, n_pad), lambda i: (0, 0)),       # bias:   constant -> resident
            ],
            out_specs=pl.BlockSpec((tm, n_pad), lambda i: (i, 0)),
        ),
        compiler_params=pltpu.CompilerParams(
            dimension_semantics=("parallel",),                    # megacore-shardable on v7x
            vmem_limit_bytes=vmem_limit,
        ),
        cost_estimate=cost,
    )(xp, w2d, b2d)

    # Drop padding only if it was actually added: the column slice costs a full
    # output read+write, so for 128-aligned embed dims (e.g. ViT's 768) nothing
    # is emitted; the row slice is a cheap contiguous trim.
    if n_pad != E:
        out = out[:, :E]
    if m_pad != M:
        out = out[:M]
    return out.reshape(B, num_patches, E)


if __name__ == "__main__":
    # Small shapes consistent with the module semantics.
    B, C, H, W = 2, 4, 16, 16
    patch = (8, 8)
    embed_dim = 32

    key = jax.random.PRNGKey(0)
    kx, kw, kb = jax.random.split(key, 3)

    x = jax.random.normal(kx, (B, C, H, W), dtype=jnp.float32)
    # Deterministic synthetic conv parameters (same shapes as nn.Conv2d in __init__).
    weight = jax.random.normal(kw, (embed_dim, C, patch[0], patch[1]), dtype=jnp.float32) * 0.02
    bias = jax.random.normal(kb, (embed_dim,), dtype=jnp.float32) * 0.02

    fn = jax.jit(patch_embed, static_argnames=("patch_size", "block_m", "out_dtype"))
    out = fn(x, weight, bias, patch_size=patch)
    out = jax.block_until_ready(out)

    # Reference check in plain JAX (lax conv) to validate kernel semantics.
    ref = jax.lax.conv_general_dilated(
        x, weight, window_strides=patch, padding="VALID",
        dimension_numbers=("NCHW", "OIHW", "NCHW"),
    ) + bias.reshape(1, embed_dim, 1, 1)
    ref = ref.reshape(B, embed_dim, -1).transpose(0, 2, 1)

    assert out.shape == (B, (H // patch[0]) * (W // patch[1]), embed_dim)
    # bf16 matmul operands (f32 accumulation) -> slightly looser tolerance than pure f32.
    assert jnp.allclose(out, ref, atol=3e-2, rtol=3e-2)

    print("KERNEL_OK")
</pallas_src>

<mosaic_0001>
module attributes {stable_mosaic.version = 11 : i64} {
  func.func @_patch_embed_kernel(%arg0: i32, %arg1: memref<16x256xbf16, #tpu.memory_space<vmem>>, %arg2: memref<256x128xbf16, #tpu.memory_space<vmem>>, %arg3: memref<1x128xf32, #tpu.memory_space<vmem>>, %arg4: memref<16x128xf32, #tpu.memory_space<vmem>>) attributes {dimension_semantics = [#tpu.dimension_semantics<parallel>], iteration_bounds = array<i64: 1>, scalar_prefetch = 0 : i64, scratch_operands = 0 : i64, tpu.core_type = #tpu.core_type<tc>, window_params = [{transform_indices = @transform_0, window_bounds = array<i64: 16, 256>}, {pipeline_mode = #tpu.pipeline_mode<synchronous>, transform_indices = @transform_1, window_bounds = array<i64: 256, 128>}, {pipeline_mode = #tpu.pipeline_mode<synchronous>, transform_indices = @transform_2, window_bounds = array<i64: 1, 128>}, {transform_indices = @transform_3, window_bounds = array<i64: 16, 128>}]} {
    %c0 = arith.constant 0 : index
    %c0_0 = arith.constant 0 : index
    %0 = vector.load %arg1[%c0, %c0_0] : memref<16x256xbf16, #tpu.memory_space<vmem>>, vector<16x256xbf16>
    %c0_1 = arith.constant 0 : index
    %c0_2 = arith.constant 0 : index
    %1 = vector.load %arg2[%c0_1, %c0_2] : memref<256x128xbf16, #tpu.memory_space<vmem>>, vector<256x128xbf16>
    %cst = arith.constant dense<0.000000e+00> : vector<16x128xf32>
    %2 = tpu.matmul %0, %1, %cst {dimension_numbers = #tpu.dot_dimension_numbers<[1], [0], [0], [1], [0, 0, 1, 1], [], []>} : vector<16x256xbf16>, vector<256x128xbf16>, vector<16x128xf32> -> vector<16x128xf32>
    %c0_3 = arith.constant 0 : index
    %c0_4 = arith.constant 0 : index
    %3 = vector.load %arg3[%c0_3, %c0_4] : memref<1x128xf32, #tpu.memory_space<vmem>>, vector<1x128xf32>
    %4 = vector.broadcast %3 : vector<1x128xf32> to vector<16x128xf32>
    %5 = arith.addf %2, %4 : vector<16x128xf32>
    %c0_5 = arith.constant 0 : index
    %c0_6 = arith.constant 0 : index
    %6 = vector.load %arg4[%c0_5, %c0_6] : memref<16x128xf32, #tpu.memory_space<vmem>>, vector<16x128xf32>
    tpu.vector_store %arg4[%c0_5, %c0_6], %5 {strides = array<i32>} : memref<16x128xf32, #tpu.memory_space<vmem>>, vector<16x128xf32>,
    return
  }
  func.func @transform_0(%arg0: i32) -> (i32, i32) {
    %c0_i32 = arith.constant 0 : i32
    %c0_i32_0 = arith.constant 0 : i32
    return %arg0, %c0_i32 : i32, i32
  }
  func.func @transform_1(%arg0: i32) -> (i32, i32) {
    %c0_i32 = arith.constant 0 : i32
    %c0_i32_0 = arith.constant 0 : i32
    %c0_i32_1 = arith.constant 0 : i32
    return %c0_i32, %c0_i32_0 : i32, i32
  }
  func.func @transform_2(%arg0: i32) -> (i32, i32) {
    %c0_i32 = arith.constant 0 : i32
    %c0_i32_0 = arith.constant 0 : i32
    %c0_i32_1 = arith.constant 0 : i32
    return %c0_i32, %c0_i32_0 : i32, i32
  }
  func.func @transform_3(%arg0: i32) -> (i32, i32) {
    %c0_i32 = arith.constant 0 : i32
    %c0_i32_0 = arith.constant 0 : i32
    return %arg0, %c0_i32 : i32, i32
  }
}

</mosaic_0001>

<llo_original>
// kernel: patch_embed.1
$region0: #{patch_embed.1}
  #allocation0 [shape = 'u32[]', space=smem, size = 0x4, offset = 0x4, fixed_abs, tag = 'smem constant byte address 0x4 - core index']
  #allocation1 [shape = 'u32[72,128]{1,0:T(1,128)}', space=vmem, size = 0x9000, scoped, tag = 'internal scratch']
  %s0 = inlined_call_operand.vmem [shape: bf16[16,256], index: 0, kind: input, shape index: {}]
  %s1 = inlined_call_operand.vmem [shape: bf16[256,128], index: 1, kind: input, shape index: {}]
  %s2 = inlined_call_operand.vmem [shape: f32[1,128], index: 2, kind: input, shape index: {}]
  %s3 = inlined_call_operand.vmem [shape: f32[16,128], index: 3, kind: output, shape index: {}]
  %s4 = sld [smem:[#allocation0]]
  $region22: #{patch_embed.1} parent=0
    _
  %s6 = ssub.s32 1, %s4
  %s7 = scalar_select 0, %s6, %s4
  // Predicated region
  $region2: #{patch_embed.1} parent=0 // pred_check
    _
  $region3: #{patch_embed.1} parent=0 // pred_check_branch
    %9 = sbr.rel (0) target = $region5
  $region4: #{patch_embed.1} parent=0 // pred_region
    _
  $region5: #{patch_embed.1} parent=0 // pred_fallthru
    _
  // Predicated region
  $region6: #{patch_embed.1} parent=0 // pred_check
    _
  $region7: #{patch_embed.1} parent=0 // pred_check_branch
    %11 = sbr.rel (0) target = $region9
  $region8: #{patch_embed.1} parent=0 // pred_region
    _
  $region9: #{patch_embed.1} parent=0 // pred_fallthru
    _
  // Predicated region
  $region10: #{patch_embed.1} parent=0 // pred_check
    _
  $region11: #{patch_embed.1} parent=0 // pred_check_branch
    %13 = sbr.rel (0) target = $region13
  $region12: #{patch_embed.1} parent=0 // pred_region
    _
  $region13: #{patch_embed.1} parent=0 // pred_fallthru
    _
  %v14 = vld [vmem:[%s0] sm:$0xff]
  %v15 = vld [vmem:[%s0 + $0x8] sm:$0xff]
  %v16 = vld [vmem:[%s1] sm:$0xf]
  %v17 = vld [vmem:[%s1 + $0x4] sm:$0xf]
  %v18 = vld [vmem:[%s1 + $0x8] sm:$0xf]
  %v19 = vld [vmem:[%s1 + $0xc] sm:$0xf]
  %v20 = vld [vmem:[%s1 + $0x10] sm:$0xf]
  %v21 = vld [vmem:[%s1 + $0x14] sm:$0xf]
  %v22 = vld [vmem:[%s1 + $0x18] sm:$0xf]
  %v23 = vld [vmem:[%s1 + $0x1c] sm:$0xf]
  %v24 = vld [vmem:[%s1 + $0x20] sm:$0xf]
  %v25 = vld [vmem:[%s1 + $0x24] sm:$0xf]
  %v26 = vld [vmem:[%s1 + $0x28] sm:$0xf]
  %v27 = vld [vmem:[%s1 + $0x2c] sm:$0xf]
  %v28 = vld [vmem:[%s1 + $0x30] sm:$0xf]
  %v29 = vld [vmem:[%s1 + $0x34] sm:$0xf]
  %v30 = vld [vmem:[%s1 + $0x38] sm:$0xf]
  %v31 = vld [vmem:[%s1 + $0x3c] sm:$0xf]
  %v32 = vld [vmem:[%s1 + $0x40] sm:$0xf]
  %v33 = vld [vmem:[%s1 + $0x44] sm:$0xf]
  %v34 = vld [vmem:[%s1 + $0x48] sm:$0xf]
  %v35 = vld [vmem:[%s1 + $0x4c] sm:$0xf]
  %v36 = vld [vmem:[%s1 + $0x50] sm:$0xf]
  %v37 = vld [vmem:[%s1 + $0x54] sm:$0xf]
  %v38 = vld [vmem:[%s1 + $0x58] sm:$0xf]
  %v39 = vld [vmem:[%s1 + $0x5c] sm:$0xf]
  %v40 = vld [vmem:[%s1 + $0x60] sm:$0xf]
  %v41 = vld [vmem:[%s1 + $0x64] sm:$0xf]
  %v42 = vld [vmem:[%s1 + $0x68] sm:$0xf]
  %v43 = vld [vmem:[%s1 + $0x6c] sm:$0xf]
  %v44 = vld [vmem:[%s1 + $0x70] sm:$0xf]
  %v45 = vld [vmem:[%s1 + $0x74] sm:$0xf]
  %v46 = vld [vmem:[%s1 + $0x78] sm:$0xf]
  %v47 = vld [vmem:[%s1 + $0x7c] sm:$0xf]
  %v48 = vld [vmem:[%s2] sm:$0x1]
  %v50 = vperm.slane %v48, 0
  %v54 = vunpack.c.l.b16 %v14
  %v55 = vunpack.c.h.b16 %v14
  %v56 = vunpack.c.l.b16 %v15
  %v57 = vunpack.c.h.b16 %v15
  %v58 = vpack.c.b16 %v56, %v54
  %v59 = vpack.c.b16 %v57, %v55
  %v94 = vunpack.c.l.b16 %v16
  %v95 = vunpack.c.l.b16 %v17
  %v96 = vunpack.c.l.b16 %v18
  %v97 = vunpack.c.l.b16 %v19
  %v98 = vunpack.c.l.b16 %v20
  %v99 = vunpack.c.l.b16 %v21
  %v100 = vunpack.c.l.b16 %v22
  %v101 = vunpack.c.l.b16 %v23
  %v102 = vunpack.c.l.b16 %v24
  %v103 = vunpack.c.l.b16 %v25
  %v104 = vunpack.c.l.b16 %v26
  %v105 = vunpack.c.l.b16 %v27
  %v106 = vunpack.c.l.b16 %v28
  %v107 = vunpack.c.l.b16 %v29
  %v108 = vunpack.c.l.b16 %v30
  %v109 = vunpack.c.l.b16 %v31
  %v110 = vunpack.c.l.b16 %v32
  %v111 = vunpack.c.l.b16 %v33
  %v112 = vunpack.c.l.b16 %v34
  %v113 = vunpack.c.l.b16 %v35
  %v114 = vunpack.c.l.b16 %v36
  %v115 = vunpack.c.l.b16 %v37
  %v116 = vunpack.c.l.b16 %v38
  %v117 = vunpack.c.l.b16 %v39
  %v118 = vunpack.c.l.b16 %v40
  %v119 = vunpack.c.l.b16 %v41
  %v120 = vunpack.c.l.b16 %v42
  %v121 = vunpack.c.l.b16 %v43
  %v122 = vunpack.c.l.b16 %v44
  %v123 = vunpack.c.l.b16 %v45
  %v124 = vunpack.c.l.b16 %v46
  %v125 = vunpack.c.l.b16 %v47
  %v126 = vpack.c.b16 %v95, %v94
  %v127 = vpack.c.b16 %v97, %v96
  %v128 = vpack.c.b16 %v99, %v98
  %v129 = vpack.c.b16 %v101, %v100
  %v130 = vpack.c.b16 %v103, %v102
  %v131 = vpack.c.b16 %v105, %v104
  %v132 = vpack.c.b16 %v107, %v106
  %v133 = vpack.c.b16 %v109, %v108
  %v134 = vpack.c.b16 %v111, %v110
  %v135 = vpack.c.b16 %v113, %v112
  %v136 = vpack.c.b16 %v115, %v114
  %v137 = vpack.c.b16 %v117, %v116
  %v138 = vpack.c.b16 %v119, %v118
  %v139 = vpack.c.b16 %v121, %v120
  %v140 = vpack.c.b16 %v123, %v122
  %v141 = vpack.c.b16 %v125, %v124
  %158 = vmatpush.bf16.msra.mxu0 %v133
  %159 = vmatpush.bf16.msra.mxu0 %v132
  %160 = vmatpush.bf16.msra.mxu0 %v131
  %161 = vmatpush.bf16.msra.mxu0 %v130
  %162 = vmatpush.bf16.msra.mxu0 %v129
  %163 = vmatpush.bf16.msra.mxu0 %v128
  %164 = vmatpush.bf16.msra.mxu0 %v127
  %165 = vmatpush.bf16.msra.mxu0 %v126
  %166 = vmatmul.bf16.gmra.mxu0 %v58
  %v167 = vpop.f32.mrf.mxu0
  %v168 = vadd.f32 %v50, %v167
  %v169 = vpop.f32.mrf.mxu0
  %v170 = vadd.f32 %v50, %v169
  %171 = vdwg.mxu0
  %172 = vmatpush.bf16.msra.mxu0 %v141
  %173 = vmatpush.bf16.msra.mxu0 %v140
  %174 = vmatpush.bf16.msra.mxu0 %v139
  %175 = vmatpush.bf16.msra.mxu0 %v138
  %176 = vmatpush.bf16.msra.mxu0 %v137
  %177 = vmatpush.bf16.msra.mxu0 %v136
  %178 = vmatpush.bf16.msra.mxu0 %v135
  %179 = vmatpush.bf16.msra.mxu0 %v134
  %180 = vmatmul.bf16.gmra.mxu0 %v59
  %v181 = vpop.f32.mrf.mxu0
  %v182 = vadd.f32 %v168, %v181
  %v183 = vpop.f32.mrf.mxu0
  %v184 = vadd.f32 %v170, %v183
  %185 = vdwg.mxu0
  %186 = vst [vmem:[%s3] sm:$0xff] %v182
  %187 = vst [vmem:[%s3 + $0x8] sm:$0xff] %v184
  // Predicated region
  $region14: #{patch_embed.1} parent=0 // pred_check
    _
  $region15: #{patch_embed.1} parent=0 // pred_check_branch
    %189 = sbr.rel (0) target = $region17
  $region16: #{patch_embed.1} parent=0 // pred_region
    _
  $region17: #{patch_embed.1} parent=0 // pred_fallthru
    _
  // Predicated region
  $region18: #{patch_embed.1} parent=0 // pred_check
    _
  $region19: #{patch_embed.1} parent=0 // pred_check_branch
    %191 = sbr.rel (0) target = $region21
  $region20: #{patch_embed.1} parent=0 // pred_region
    _
  $region21: #{patch_embed.1} parent=0 // pred_fallthru
    _

</llo_original>
